<compile_context>
chip_gen: v6e
topology: v6e:2x2x1
jax: 0.10.0
libtpu: 0.0.40
codegen_flags: <defaults>
</compile_context>

<pallas_src>
import functools

import jax
import jax.numpy as jnp
from jax.experimental import pallas as pl
from jax.experimental.pallas import tpu as pltpu


def _round_up(x: int, m: int) -> int:
    return (x + m - 1) // m * m


def _cdiv(a: int, b: int) -> int:
    return -(-a // b)


# --------------------------------------------------------------------------
# Kernels
# --------------------------------------------------------------------------
def _probe_cls_kernel(cls_ref, w1_ref, b1_ref, w2_ref, b2_ref, out_ref):
    """cls_ref: (TB, H). Probe head only — CLS rows already sliced in wrapper."""
    x = cls_ref[...].astype(jnp.float32)
    h = jnp.dot(x, w1_ref[...], preferred_element_type=jnp.float32) + b1_ref[...]
    h = jnp.maximum(h, 0.0)
    y = jnp.dot(h, w2_ref[...], preferred_element_type=jnp.float32) + b2_ref[...]
    out_ref[...] = jax.nn.sigmoid(y)


def _probe_mean_kernel(hs_ref, m_ref, inv_ref, w1_ref, b1_ref, w2_ref, b2_ref,
                       out_ref, sum_ref, *, seq_len, seq_tile, ragged):
    """Streaming masked-sum pooling over seq tiles + probe head at the end.

    hs_ref: (TB, TS, H) native dtype, m_ref: (TB, TS, 1), inv_ref: (TB, 1)
    precomputed 1/clamp(count).  Seq is the last grid axis ("arbitrary");
    sum_ref is a resident f32 VMEM accumulator.
    """
    s = pl.program_id(1)

    @pl.when(s == 0)
    def _():
        sum_ref[...] = jnp.zeros_like(sum_ref)

    hs = hs_ref[...].astype(jnp.float32)          # (TB, TS, H)
    m = m_ref[...].astype(jnp.float32)            # (TB, TS, 1)
    contrib = hs * m
    if ragged:
        # Ragged last seq tile: zero positions past the true sequence length
        # (OOB block contents are undefined; jnp.where keeps NaNs out).
        pos = jax.lax.broadcasted_iota(jnp.int32, m.shape, 1) + s * seq_tile
        contrib = jnp.where(pos < seq_len, contrib, 0.0)
    sum_ref[...] += jnp.sum(contrib, axis=1)      # (TB, H)

    @pl.when(s == pl.num_programs(1) - 1)
    def _():
        repr_ = sum_ref[...] * inv_ref[...].astype(jnp.float32)
        h = jnp.dot(repr_, w1_ref[...], preferred_element_type=jnp.float32) + b1_ref[...]
        h = jnp.maximum(h, 0.0)
        y = jnp.dot(h, w2_ref[...], preferred_element_type=jnp.float32) + b2_ref[...]
        out_ref[...] = jax.nn.sigmoid(y)


# --------------------------------------------------------------------------
# Wrapper
# --------------------------------------------------------------------------
def mlp_probe_forward(hidden_states, attention_mask, w1, b1, w2, b2,
                      *, use_mean_pooling: bool = False, max_seq_tile=None):
    """hidden_states: [B, S, H] (f32 or bf16); attention_mask: [B, S].
    w1: [H, P], b1: [1, P], w2: [P, O], b2: [1, O]. Returns [B, O] f32."""
    B, S, H = hidden_states.shape
    P = w1.shape[1]
    O = w2.shape[1]
    f32 = jnp.float32

    # Lane-dense padding for the tiny probe weights only (zero pad => exact).
    Pp = _round_up(P, 128)
    Op = _round_up(O, 128)
    w1p = jnp.zeros((H, Pp), f32).at[:, :P].set(w1.astype(f32))
    b1p = jnp.zeros((1, Pp), f32).at[:, :P].set(b1.astype(f32))
    w2p = jnp.zeros((Pp, Op), f32).at[:P, :O].set(w2.astype(f32))
    b2p = jnp.zeros((1, Op), f32).at[:, :O].set(b2.astype(f32))
    probe_bytes = (H * Pp + Pp + Pp * Op + Op) * 4

    # Batch tile: full batch for small B (no pad); otherwise a multiple of 8
    # chosen so there are >= 2 batch tiles (feeds both TensorCores on v7x).
    if B <= 8:
        TB = B
    else:
        TB = min(128, _round_up((B + 1) // 2, 8))

    hs_item = jnp.dtype(hidden_states.dtype).itemsize
    m_item = jnp.dtype(attention_mask.dtype).itemsize

    if not use_mean_pooling:
        # Only the CLS rows are moved to the kernel: [B, H], not [B, S, H].
        cls = hidden_states[:, 0, :]
        grid_b = _cdiv(B, TB)

        ws = 2 * TB * H * hs_item + 2 * probe_bytes + 2 * TB * Op * 4
        vmem_limit = int(min(max(ws + 8 * 1024 * 1024, 16 * 1024 * 1024),
                             52 * 1024 * 1024))

        out = pl.pallas_call(
            _probe_cls_kernel,
            out_shape=jax.ShapeDtypeStruct((B, Op), f32),
            grid_spec=pltpu.PrefetchScalarGridSpec(
                num_scalar_prefetch=0,
                grid=(grid_b,),
                in_specs=[
                    pl.BlockSpec((TB, H), lambda b: (b, 0)),
                    pl.BlockSpec((H, Pp), lambda b: (0, 0)),
                    pl.BlockSpec((1, Pp), lambda b: (0, 0)),
                    pl.BlockSpec((Pp, Op), lambda b: (0, 0)),
                    pl.BlockSpec((1, Op), lambda b: (0, 0)),
                ],
                out_specs=pl.BlockSpec((TB, Op), lambda b: (b, 0)),
            ),
            compiler_params=pltpu.CompilerParams(
                dimension_semantics=("parallel",),
                vmem_limit_bytes=vmem_limit,
            ),
        )(cls, w1p, b1p, w2p, b2p)
        return out[:, :O]

    # ---- masked mean pooling path: stream (TB, TS, H) tiles over seq ----
    mask3 = attention_mask[:, :, None]                                    # (B, S, 1)
    counts = jnp.sum(attention_mask.astype(f32), axis=1, keepdims=True)   # (B, 1)
    inv_cnt = 1.0 / jnp.maximum(counts, 1e-9)                             # (B, 1)

    # Size (TB, TS) from the real double-buffered working set; 44 MiB budget is
    # safe on v5e/v6e/v7x, target ~12 MiB hs tiles to amortize per-step cost.
    budget = 44 * 1024 * 1024
    target_hs_tile = 12 * 1024 * 1024

    def fixed_bytes(tb):
        return (2 * probe_bytes           # w1/b1/w2/b2, double-buffered
                + 2 * tb * 4              # inv_cnt, double-buffered
                + tb * H * 4              # f32 sum accumulator
                + 2 * tb * Op * 4)        # output, double-buffered

    def ts_for(tb):
        per_row = 2 * tb * (H * hs_item + m_item)   # double-buffered stream bytes
        avail = budget - fixed_bytes(tb)
        if avail < per_row:
            return 0
        ts = avail // per_row
        ts = min(ts, max(8, target_hs_tile // max(tb * H * hs_item, 1)))
        return int(ts)

    TS = ts_for(TB)
    while TS < 8 and TB > 8:
        TB = max(8, ((TB // 2) + 7) // 8 * 8)
        TS = ts_for(TB)
    if max_seq_tile is not None:
        TS = min(TS if TS > 0 else max_seq_tile, max_seq_tile)
    if TS >= S:
        TS = S                      # full seq extent (legal regardless of 8-mult)
    else:
        TS = max(8, (TS // 8) * 8)  # multiple of 8 for the sublane dim

    grid_b = _cdiv(B, TB)
    grid_s = _cdiv(S, TS)
    ragged = (S % TS) != 0

    ws = fixed_bytes(TB) + 2 * TB * TS * (H * hs_item + m_item)
    vmem_limit = int(min(max(ws + 8 * 1024 * 1024, 24 * 1024 * 1024),
                         52 * 1024 * 1024))

    kernel = functools.partial(_probe_mean_kernel,
                               seq_len=S, seq_tile=TS, ragged=ragged)

    out = pl.pallas_call(
        kernel,
        out_shape=jax.ShapeDtypeStruct((B, Op), f32),
        grid_spec=pltpu.PrefetchScalarGridSpec(
            num_scalar_prefetch=0,
            grid=(grid_b, grid_s),
            in_specs=[
                pl.BlockSpec((TB, TS, H), lambda b, s: (b, s, 0)),
                pl.BlockSpec((TB, TS, 1), lambda b, s: (b, s, 0)),
                pl.BlockSpec((TB, 1), lambda b, s: (b, 0)),
                pl.BlockSpec((H, Pp), lambda b, s: (0, 0)),
                pl.BlockSpec((1, Pp), lambda b, s: (0, 0)),
                pl.BlockSpec((Pp, Op), lambda b, s: (0, 0)),
                pl.BlockSpec((1, Op), lambda b, s: (0, 0)),
            ],
            out_specs=pl.BlockSpec((TB, Op), lambda b, s: (b, 0)),
            scratch_shapes=[
                pltpu.VMEM((TB, H), jnp.float32),   # running sum(hs * mask)
            ],
        ),
        compiler_params=pltpu.CompilerParams(
            dimension_semantics=("parallel", "arbitrary"),
            vmem_limit_bytes=vmem_limit,
        ),
    )(hidden_states, mask3, inv_cnt, w1p, b1p, w2p, b2p)
    return out[:, :O]


# --------------------------------------------------------------------------
# Pure-JAX reference (mirrors MLPProbe.forward after the encoder)
# --------------------------------------------------------------------------
def _reference(hidden_states, attention_mask, w1, b1, w2, b2, use_mean_pooling):
    hs = hidden_states.astype(jnp.float32)
    if use_mean_pooling:
        m = attention_mask.astype(jnp.float32)[:, :, None]
        repr_ = jnp.sum(hs * m, 1) / jnp.maximum(jnp.sum(m, 1), 1e-9)
    else:
        repr_ = hs[:, 0, :]
    h = jnp.maximum(repr_ @ w1 + b1, 0.0)
    return jax.nn.sigmoid(h @ w2 + b2)


if __name__ == "__main__":
    # Small, module-consistent shapes: encoder hidden=32, probe_hidden_size=96,
    # num_outputs=1 (classification -> sigmoid).
    H, P, O = 32, 96, 1

    key = jax.random.PRNGKey(0)
    k_hs, k_w1, k_w2, k_hs2, k_m2 = jax.random.split(key, 5)

    # weight_init='normal': N(0, 0.02); biases zero (see _initialize_weights).
    # Stored pre-transposed as [in, out] to match torch's x @ W^T + b.
    w1 = 0.02 * jax.random.normal(k_w1, (H, P), dtype=jnp.float32)
    b1 = jnp.zeros((1, P), dtype=jnp.float32)
    w2 = 0.02 * jax.random.normal(k_w2, (P, O), dtype=jnp.float32)
    b2 = jnp.zeros((1, O), dtype=jnp.float32)

    # TODO(synk): training-mode dropout would need pltpu.prng_seed /
    # pltpu.stateful_bernoulli inside the kernel; eval-mode identity here.

    # ---- case 1: batch=2, seq=8 — CLS pooling (module default) ----
    B, S = 2, 8
    hidden_states = jax.random.normal(k_hs, (B, S, H), dtype=jnp.float32)
    attention_mask = jnp.ones((B, S), dtype=jnp.float32)

    out = jax.block_until_ready(
        mlp_probe_forward(hidden_states, attention_mask, w1, b1, w2, b2,
                          use_mean_pooling=False))
    ref = _reference(hidden_states, attention_mask, w1, b1, w2, b2, False)
    assert out.shape == (B, O)
    assert jnp.allclose(out, ref, atol=1e-5, rtol=1e-5)

    # ---- case 2: batch=2, seq=8 — masked mean pooling ----
    mask2 = attention_mask.at[:, S // 2:].set(0.0)
    out2 = jax.block_until_ready(
        mlp_probe_forward(hidden_states, mask2, w1, b1, w2, b2,
                          use_mean_pooling=True))
    ref2 = _reference(hidden_states, mask2, w1, b1, w2, b2, True)
    assert out2.shape == (B, O)
    assert jnp.allclose(out2, ref2, atol=1e-5, rtol=1e-5)

    # ---- case 3: ragged batch (B=10) and ragged seq tiles (S=20, TS forced 8) ----
    B3, S3 = 10, 20
    hs3 = jax.random.normal(k_hs2, (B3, S3, H), dtype=jnp.float32)
    mask3 = (jax.random.uniform(k_m2, (B3, S3)) > 0.3).astype(jnp.float32)
    mask3 = mask3.at[:, 0].set(1.0)  # keep at least one valid token per row

    out3 = jax.block_until_ready(
        mlp_probe_forward(hs3, mask3, w1, b1, w2, b2,
                          use_mean_pooling=True, max_seq_tile=8))
    ref3 = _reference(hs3, mask3, w1, b1, w2, b2, True)
    assert out3.shape == (B3, O)
    assert jnp.allclose(out3, ref3, atol=1e-5, rtol=1e-5)

    out4 = jax.block_until_ready(
        mlp_probe_forward(hs3, mask3, w1, b1, w2, b2, use_mean_pooling=False))
    ref4 = _reference(hs3, mask3, w1, b1, w2, b2, False)
    assert out4.shape == (B3, O)
    assert jnp.allclose(out4, ref4, atol=1e-5, rtol=1e-5)

    print("KERNEL_OK")
</pallas_src>

<mosaic_0001>
module attributes {stable_mosaic.version = 11 : i64} {
  func.func @_probe_cls_kernel(%arg0: i32, %arg1: memref<2x32xf32, #tpu.memory_space<vmem>>, %arg2: memref<32x128xf32, #tpu.memory_space<vmem>>, %arg3: memref<1x128xf32, #tpu.memory_space<vmem>>, %arg4: memref<128x128xf32, #tpu.memory_space<vmem>>, %arg5: memref<1x128xf32, #tpu.memory_space<vmem>>, %arg6: memref<2x128xf32, #tpu.memory_space<vmem>>) attributes {dimension_semantics = [#tpu.dimension_semantics<parallel>], iteration_bounds = array<i64: 1>, scalar_prefetch = 0 : i64, scratch_operands = 0 : i64, tpu.core_type = #tpu.core_type<tc>, window_params = [{transform_indices = @transform_0, window_bounds = array<i64: 2, 32>}, {pipeline_mode = #tpu.pipeline_mode<synchronous>, transform_indices = @transform_1, window_bounds = array<i64: 32, 128>}, {pipeline_mode = #tpu.pipeline_mode<synchronous>, transform_indices = @transform_2, window_bounds = array<i64: 1, 128>}, {pipeline_mode = #tpu.pipeline_mode<synchronous>, transform_indices = @transform_3, window_bounds = array<i64: 128, 128>}, {pipeline_mode = #tpu.pipeline_mode<synchronous>, transform_indices = @transform_4, window_bounds = array<i64: 1, 128>}, {transform_indices = @transform_5, window_bounds = array<i64: 2, 128>}]} {
    %c0 = arith.constant 0 : index
    %c0_0 = arith.constant 0 : index
    %0 = vector.load %arg1[%c0, %c0_0] : memref<2x32xf32, #tpu.memory_space<vmem>>, vector<2x32xf32>
    %c0_1 = arith.constant 0 : index
    %c0_2 = arith.constant 0 : index
    %1 = vector.load %arg2[%c0_1, %c0_2] : memref<32x128xf32, #tpu.memory_space<vmem>>, vector<32x128xf32>
    %cst = arith.constant dense<0.000000e+00> : vector<2x128xf32>
    %2 = tpu.matmul %0, %1, %cst {dimension_numbers = #tpu.dot_dimension_numbers<[1], [0], [0], [1], [0, 0, 1, 1], [], []>} : vector<2x32xf32>, vector<32x128xf32>, vector<2x128xf32> -> vector<2x128xf32>
    %c0_3 = arith.constant 0 : index
    %c0_4 = arith.constant 0 : index
    %3 = vector.load %arg3[%c0_3, %c0_4] : memref<1x128xf32, #tpu.memory_space<vmem>>, vector<1x128xf32>
    %4 = vector.broadcast %3 : vector<1x128xf32> to vector<2x128xf32>
    %5 = arith.addf %2, %4 : vector<2x128xf32>
    %cst_5 = arith.constant 0.000000e+00 : f32
    %6 = vector.broadcast %cst_5 : f32 to vector<2x128xf32>
    %7 = arith.maximumf %5, %6 : vector<2x128xf32>
    %c0_6 = arith.constant 0 : index
    %c0_7 = arith.constant 0 : index
    %8 = vector.load %arg4[%c0_6, %c0_7] : memref<128x128xf32, #tpu.memory_space<vmem>>, vector<128x128xf32>
    %cst_8 = arith.constant dense<0.000000e+00> : vector<2x128xf32>
    %9 = tpu.matmul %7, %8, %cst_8 {dimension_numbers = #tpu.dot_dimension_numbers<[1], [0], [0], [1], [0, 0, 1, 1], [], []>} : vector<2x128xf32>, vector<128x128xf32>, vector<2x128xf32> -> vector<2x128xf32>
    %c0_9 = arith.constant 0 : index
    %c0_10 = arith.constant 0 : index
    %10 = vector.load %arg5[%c0_9, %c0_10] : memref<1x128xf32, #tpu.memory_space<vmem>>, vector<1x128xf32>
    %11 = vector.broadcast %10 : vector<1x128xf32> to vector<2x128xf32>
    %12 = arith.addf %9, %11 : vector<2x128xf32>
    %13 = arith.negf %12 : vector<2x128xf32>
    %14 = math.exp %13 : vector<2x128xf32>
    %cst_11 = arith.constant 1.000000e+00 : f32
    %15 = vector.broadcast %cst_11 : f32 to vector<2x128xf32>
    %16 = arith.addf %15, %14 : vector<2x128xf32>
    %17 = arith.divf %15, %16 : vector<2x128xf32>
    %c0_12 = arith.constant 0 : index
    %c0_13 = arith.constant 0 : index
    %18 = vector.load %arg6[%c0_12, %c0_13] : memref<2x128xf32, #tpu.memory_space<vmem>>, vector<2x128xf32>
    tpu.vector_store %arg6[%c0_12, %c0_13], %17 {strides = array<i32>} : memref<2x128xf32, #tpu.memory_space<vmem>>, vector<2x128xf32>,
    return
  }
  func.func @transform_0(%arg0: i32) -> (i32, i32) {
    %c0_i32 = arith.constant 0 : i32
    %c0_i32_0 = arith.constant 0 : i32
    return %arg0, %c0_i32 : i32, i32
  }
  func.func @transform_1(%arg0: i32) -> (i32, i32) {
    %c0_i32 = arith.constant 0 : i32
    %c0_i32_0 = arith.constant 0 : i32
    %c0_i32_1 = arith.constant 0 : i32
    return %c0_i32, %c0_i32_0 : i32, i32
  }
  func.func @transform_2(%arg0: i32) -> (i32, i32) {
    %c0_i32 = arith.constant 0 : i32
    %c0_i32_0 = arith.constant 0 : i32
    %c0_i32_1 = arith.constant 0 : i32
    return %c0_i32, %c0_i32_0 : i32, i32
  }
  func.func @transform_3(%arg0: i32) -> (i32, i32) {
    %c0_i32 = arith.constant 0 : i32
    %c0_i32_0 = arith.constant 0 : i32
    %c0_i32_1 = arith.constant 0 : i32
    return %c0_i32, %c0_i32_0 : i32, i32
  }
  func.func @transform_4(%arg0: i32) -> (i32, i32) {
    %c0_i32 = arith.constant 0 : i32
    %c0_i32_0 = arith.constant 0 : i32
    %c0_i32_1 = arith.constant 0 : i32
    return %c0_i32, %c0_i32_0 : i32, i32
  }
  func.func @transform_5(%arg0: i32) -> (i32, i32) {
    %c0_i32 = arith.constant 0 : i32
    %c0_i32_0 = arith.constant 0 : i32
    return %arg0, %c0_i32 : i32, i32
  }
}

</mosaic_0001>

<llo_original>
// kernel: tpu_custom_call.1
$region0: #{tpu_custom_call.1}
  #allocation0 [shape = 'u32[]', space=smem, size = 0x4, offset = 0x4, fixed_abs, tag = 'smem constant byte address 0x4 - core index']
  #allocation1 [shape = 'u32[144,128]{1,0:T(1,128)}', space=vmem, size = 0x12000, scoped, tag = 'internal scratch']
  %s0 = inlined_call_operand.hbm [shape: f32[2,32], index: 0, kind: input, shape index: {}]
  %s1 = inlined_call_operand.hbm [shape: f32[32,128], index: 1, kind: input, shape index: {}]
  %s2 = inlined_call_operand.vmem [shape: f32[1,128], index: 2, kind: input, shape index: {}]
  %s3 = inlined_call_operand.hbm [shape: f32[128,128], index: 3, kind: input, shape index: {}]
  %s4 = inlined_call_operand.vmem [shape: f32[1,128], index: 4, kind: input, shape index: {}]
  %s5 = inlined_call_operand.hbm [shape: f32[2,128], index: 5, kind: output, shape index: {}]
  %s6 = sld [smem:[#allocation0]]
  $region42: #{tpu_custom_call.1} parent=0
    _
  %s8 = ssub.s32 1, %s6
  %s9 = scalar_select 0, %s8, %s6
  $region1: #{tpu_custom_call.1} parent=0
    #allocation2 [shape = 'u8[1024]{0}', space=vmem, size = 0x400, scoped, tag = 'input window, operand 0, single buffered']
    #allocation3 [shape = 's32[1]{0}', space=sflag, size = 0x4, scoped, tag = 'scoped memory for tpu_custom_call.1']
    #allocation4 [shape = 's32[1]{0}', space=sflag, size = 0x4, scoped, tag = 'scoped memory for tpu_custom_call.1']
    #allocation5 [shape = 'u8[16384]{0}', space=vmem, size = 0x4000, scoped, tag = 'input window, operand 1, single buffered']
    #allocation6 [shape = 's32[1]{0}', space=sflag, size = 0x4, scoped, tag = 'scoped memory for tpu_custom_call.1']
    #allocation7 [shape = 'u8[65536]{0}', space=vmem, size = 0x10000, scoped, tag = 'input window, operand 3, single buffered']
    #allocation8 [shape = 'u8[1024]{0}', space=vmem, size = 0x400, scoped, tag = 'output window, operand 0, single buffered']
    %10 = vsyncpa [#allocation3], 0
    %11 = vsyncpa [#allocation6], 0
    %12 = vsyncpa [#allocation4], 0
    // Predicated region
    $region2: #{tpu_custom_call.1} parent=1 // pred_check
      _
    $region3: #{tpu_custom_call.1} parent=1 // pred_check_branch
      %14 = sbr.rel (0) target = $region5
    $region4: #{tpu_custom_call.1} parent=1 // pred_region
      %s16 = ssub.s32 32, 32
      %17 = vsyncadd [#allocation3], %s16
      %s19 = sshll.u32 [#allocation2], 4
      %s20 = int_to_ptr.vmem [resolvable:$true] %s19
      %22 = dma.hbm_to_vmem [thread:$0]  %s0, 32, %s20, [#allocation3]
    $region5: #{tpu_custom_call.1} parent=1 // pred_fallthru
      _
    // Predicated region
    $region6: #{tpu_custom_call.1} parent=1 // pred_check
      _
    $region7: #{tpu_custom_call.1} parent=1 // pred_check_branch
      %24 = sbr.rel (0) target = $region9
    $region8: #{tpu_custom_call.1} parent=1 // pred_region
      %s26 = ssub.s32 512, 512
      %27 = vsyncadd [#allocation6], %s26
      %s28 = sshll.u32 [#allocation5], 4
      %s29 = int_to_ptr.vmem [resolvable:$true] %s28
      %34 = dma.hbm_to_vmem [thread:$0]  %s1, 512, %s29, [#allocation6], 128, 128, 8
    $region9: #{tpu_custom_call.1} parent=1 // pred_fallthru
      _
    // Predicated region
    $region10: #{tpu_custom_call.1} parent=1 // pred_check
      _
    $region11: #{tpu_custom_call.1} parent=1 // pred_check_branch
      %36 = sbr.rel (0) target = $region13
    $region12: #{tpu_custom_call.1} parent=1 // pred_region
      _
    $region13: #{tpu_custom_call.1} parent=1 // pred_fallthru
      _
    // Predicated region
    $region14: #{tpu_custom_call.1} parent=1 // pred_check
      _
    $region15: #{tpu_custom_call.1} parent=1 // pred_check_branch
      %38 = sbr.rel (0) target = $region17
    $region16: #{tpu_custom_call.1} parent=1 // pred_region
      %s40 = ssub.s32 2048, 2048
      %41 = vsyncadd [#allocation6], %s40
      %s42 = sshll.u32 [#allocation7], 4
      %s43 = int_to_ptr.vmem [resolvable:$true] %s42
      %48 = dma.hbm_to_vmem [thread:$0]  %s3, 2048, %s43, [#allocation6], 128, 128, 8
    $region17: #{tpu_custom_call.1} parent=1 // pred_fallthru
      _
    // Predicated region
    $region18: #{tpu_custom_call.1} parent=1 // pred_check
      _
    $region19: #{tpu_custom_call.1} parent=1 // pred_check_branch
      %50 = sbr.rel (0) target = $region21
    $region20: #{tpu_custom_call.1} parent=1 // pred_region
      _
    $region21: #{tpu_custom_call.1} parent=1 // pred_fallthru
      _
    // Predicated region
    $region22: #{tpu_custom_call.1} parent=1 // pred_check
      _
    $region23: #{tpu_custom_call.1} parent=1 // pred_check_branch
      %52 = sbr.rel (0) target = $region25
    $region24: #{tpu_custom_call.1} parent=1 // pred_region
      %53 = dma.done [#allocation3], 32
    $region25: #{tpu_custom_call.1} parent=1 // pred_fallthru
      _
    // Predicated region
    $region26: #{tpu_custom_call.1} parent=1 // pred_check
      _
    $region27: #{tpu_custom_call.1} parent=1 // pred_check_branch
      %55 = sbr.rel (0) target = $region29
    $region28: #{tpu_custom_call.1} parent=1 // pred_region
      %56 = dma.done [#allocation6], 512
    $region29: #{tpu_custom_call.1} parent=1 // pred_fallthru
      _
    // Predicated region
    $region30: #{tpu_custom_call.1} parent=1 // pred_check
      _
    $region31: #{tpu_custom_call.1} parent=1 // pred_check_branch
      %58 = sbr.rel (0) target = $region33
    $region32: #{tpu_custom_call.1} parent=1 // pred_region
      %59 = dma.done [#allocation6], 2048
    $region33: #{tpu_custom_call.1} parent=1 // pred_fallthru
      _
    %v60 = vld [vmem:[#allocation2] sm:$0x3]
    %v61 = vld [vmem:[#allocation5] sm:$0xff]
    %v62 = vld [vmem:[#allocation5 + $0x8] sm:$0xff]
    %v63 = vld [vmem:[#allocation5 + $0x10] sm:$0xff]
    %v64 = vld [vmem:[#allocation5 + $0x18] sm:$0xff]
    %v65 = vld [vmem:[%s2] sm:$0x1]
    %v67 = vlaneseq
    %v68 = vshrl.u32 %v67, 7
    %v69 = vsub.s32 0, %v68
    %v70 = vrot.slane %v65, %v69
    %vm72 = vcmask 261120
    %v74 = vsel %vm72, %v60, 0
    %76 = vmatprep.subr.mxu0 0.0
    %77 = vmatpush1.msra.mxu0 0.0
    %78 = vmatprep.subr.mxu0 0.0
    %79 = vmatpush1.msra.mxu0 0.0
    %80 = vmatprep.subr.mxu0 0.0
    %81 = vmatpush1.msra.mxu0 0.0
    %82 = vmatprep.subr.mxu0 0.0
    %83 = vmatpush1.msra.mxu0 0.0
    %84 = vmatprep.subr.mxu0 0.0
    %85 = vmatpush1.msra.mxu0 0.0
    %86 = vmatprep.subr.mxu0 0.0
    %87 = vmatpush1.msra.mxu0 0.0
    %88 = vmatprep.subr.mxu0 0.0
    %89 = vmatpush1.msra.mxu0 0.0
    %90 = vmatprep.subr.mxu0 0.0
    %91 = vmatpush1.msra.mxu0 0.0
    %92 = vmatprep.subr.mxu0 0.0
    %93 = vmatpush1.msra.mxu0 0.0
    %94 = vmatprep.subr.mxu0 0.0
    %95 = vmatpush1.msra.mxu0 0.0
    %96 = vmatprep.subr.mxu0 0.0
    %97 = vmatpush1.msra.mxu0 0.0
    %98 = vmatprep.subr.mxu0 0.0
    %99 = vmatpush1.msra.mxu0 0.0
    %100 = vmatprep.subr.mxu0 0.0
    %101 = vmatpush1.msra.mxu0 %v64
    %102 = vmatprep.subr.mxu0 0.0
    %103 = vmatpush1.msra.mxu0 %v63
    %104 = vmatprep.subr.mxu0 0.0
    %105 = vmatpush1.msra.mxu0 %v62
    %106 = vmatprep.subr.mxu0 0.0
    %107 = vmatpush1.msra.mxu0 %v61
    %108 = vmatprep.subr.mxu0 0.0
    %109 = vmatpush2.msra.mxu0 0.0
    %110 = vmatprep.subr.mxu0 0.0
    %111 = vmatpush2.msra.mxu0 0.0
    %112 = vmatprep.subr.mxu0 0.0
    %113 = vmatpush2.msra.mxu0 0.0
    %114 = vmatprep.subr.mxu0 0.0
    %115 = vmatpush2.msra.mxu0 0.0
    %116 = vmatprep.subr.mxu0 0.0
    %117 = vmatpush2.msra.mxu0 0.0
    %118 = vmatprep.subr.mxu0 0.0
    %119 = vmatpush2.msra.mxu0 0.0
    %120 = vmatprep.subr.mxu0 0.0
    %121 = vmatpush2.msra.mxu0 0.0
    %122 = vmatprep.subr.mxu0 0.0
    %123 = vmatpush2.msra.mxu0 0.0
    %124 = vmatprep.subr.mxu0 0.0
    %125 = vmatpush2.msra.mxu0 0.0
    %126 = vmatprep.subr.mxu0 0.0
    %127 = vmatpush2.msra.mxu0 0.0
    %128 = vmatprep.subr.mxu0 0.0
    %129 = vmatpush2.msra.mxu0 0.0
    %130 = vmatprep.subr.mxu0 0.0
    %131 = vmatpush2.msra.mxu0 0.0
    %132 = vmatprep.subr.mxu0 0.0
    %133 = vmatpush2.msra.mxu0 0.0
    %134 = vmatprep.subr.mxu0 0.0
    %135 = vmatpush2.msra.mxu0 0.0
    %136 = vmatprep.subr.mxu0 0.0
    %137 = vmatpush2.msra.mxu0 0.0
    %138 = vmatprep.subr.mxu0 0.0
    %139 = vmatpush2.msra.mxu0 0.0
    %140 = vmatprep.mubr.f32.mxu0 0.0
    %141 = vmatmul.mubr.f32.gmra.mxu0 %v74
    %v142 = vpop.f32.mrf.mxu0
    %v143 = vadd.f32 %v70, %v142
    %v144 = vpop.f32.mrf.mxu0
    %145 = vdwg.mxu0
    %v146 = vmax.f32 %v143, 0.0
    %v147 = vld [vmem:[#allocation7] sm:$0xff]
    %v148 = vld [vmem:[#allocation7 + $0x8] sm:$0xff]
    %v149 = vld [vmem:[#allocation7 + $0x10] sm:$0xff]
    %v150 = vld [vmem:[#allocation7 + $0x18] sm:$0xff]
    %v151 = vld [vmem:[#allocation7 + $0x20] sm:$0xff]
    %v152 = vld [vmem:[#allocation7 + $0x28] sm:$0xff]
    %v153 = vld [vmem:[#allocation7 + $0x30] sm:$0xff]
    %v154 = vld [vmem:[#allocation7 + $0x38] sm:$0xff]
    %v155 = vld [vmem:[#allocation7 + $0x40] sm:$0xff]
    %v156 = vld [vmem:[#allocation7 + $0x48] sm:$0xff]
    %v157 = vld [vmem:[#allocation7 + $0x50] sm:$0xff]
    %v158 = vld [vmem:[#allocation7 + $0x58] sm:$0xff]
    %v159 = vld [vmem:[#allocation7 + $0x60] sm:$0xff]
    %v160 = vld [vmem:[#allocation7 + $0x68] sm:$0xff]
    %v161 = vld [vmem:[#allocation7 + $0x70] sm:$0xff]
    %v162 = vld [vmem:[#allocation7 + $0x78] sm:$0xff]
    %v163 = vld [vmem:[%s4] sm:$0x1]
    %v165 = vlaneseq
    %v166 = vshrl.u32 %v165, 7
    %v167 = vsub.s32 0, %v166
    %v168 = vrot.slane %v163, %v167
    %170 = vmatprep.subr.mxu0 0.0
    %171 = vmatpush1.msra.mxu0 %v162
    %172 = vmatprep.subr.mxu0 0.0
    %173 = vmatpush1.msra.mxu0 %v161
    %174 = vmatprep.subr.mxu0 0.0
    %175 = vmatpush1.msra.mxu0 %v160
    %176 = vmatprep.subr.mxu0 0.0
    %177 = vmatpush1.msra.mxu0 %v159
    %178 = vmatprep.subr.mxu0 0.0
    %179 = vmatpush1.msra.mxu0 %v158
    %180 = vmatprep.subr.mxu0 0.0
    %181 = vmatpush1.msra.mxu0 %v157
    %182 = vmatprep.subr.mxu0 0.0
    %183 = vmatpush1.msra.mxu0 %v156
    %184 = vmatprep.subr.mxu0 0.0
    %185 = vmatpush1.msra.mxu0 %v155
    %186 = vmatprep.subr.mxu0 0.0
    %187 = vmatpush1.msra.mxu0 %v154
    %188 = vmatprep.subr.mxu0 0.0
    %189 = vmatpush1.msra.mxu0 %v153
    %190 = vmatprep.subr.mxu0 0.0
    %191 = vmatpush1.msra.mxu0 %v152
    %192 = vmatprep.subr.mxu0 0.0
    %193 = vmatpush1.msra.mxu0 %v151
    %194 = vmatprep.subr.mxu0 0.0
    %195 = vmatpush1.msra.mxu0 %v150
    %196 = vmatprep.subr.mxu0 0.0
    %197 = vmatpush1.msra.mxu0 %v149
    %198 = vmatprep.subr.mxu0 0.0
    %199 = vmatpush1.msra.mxu0 %v148
    %200 = vmatprep.subr.mxu0 0.0
    %201 = vmatpush1.msra.mxu0 %v147
    %202 = vmatprep.subr.mxu0 0.0
    %203 = vmatpush2.msra.mxu0 0.0
    %204 = vmatprep.subr.mxu0 0.0
    %205 = vmatpush2.msra.mxu0 0.0
    %206 = vmatprep.subr.mxu0 0.0
    %207 = vmatpush2.msra.mxu0 0.0
    %208 = vmatprep.subr.mxu0 0.0
    %209 = vmatpush2.msra.mxu0 0.0
    %210 = vmatprep.subr.mxu0 0.0
    %211 = vmatpush2.msra.mxu0 0.0
    %212 = vmatprep.subr.mxu0 0.0
    %213 = vmatpush2.msra.mxu0 0.0
    %214 = vmatprep.subr.mxu0 0.0
    %215 = vmatpush2.msra.mxu0 0.0
    %216 = vmatprep.subr.mxu0 0.0
    %217 = vmatpush2.msra.mxu0 0.0
    %218 = vmatprep.subr.mxu0 0.0
    %219 = vmatpush2.msra.mxu0 0.0
    %220 = vmatprep.subr.mxu0 0.0
    %221 = vmatpush2.msra.mxu0 0.0
    %222 = vmatprep.subr.mxu0 0.0
    %223 = vmatpush2.msra.mxu0 0.0
    %224 = vmatprep.subr.mxu0 0.0
    %225 = vmatpush2.msra.mxu0 0.0
    %226 = vmatprep.subr.mxu0 0.0
    %227 = vmatpush2.msra.mxu0 0.0
    %228 = vmatprep.subr.mxu0 0.0
    %229 = vmatpush2.msra.mxu0 0.0
    %230 = vmatprep.subr.mxu0 0.0
    %231 = vmatpush2.msra.mxu0 0.0
    %232 = vmatprep.subr.mxu0 0.0
    %233 = vmatpush2.msra.mxu0 0.0
    %234 = vmatprep.mubr.f32.mxu0 0.0
    %235 = vmatmul.mubr.f32.gmra.mxu0 %v146
    %v236 = vpop.f32.mrf.mxu0
    %v237 = vadd.f32 %v168, %v236
    %v238 = vpop.f32.mrf.mxu0
    %239 = vdwg.mxu0
    %v240 = vxor.u32 %v237, 2147483648
    %v241 = vmul.f32 %v240, 1.442695
    %v242 = vpow.pop %v241
    %v243 = vadd.f32 %v242, 1.0
    %v244 = vrcp.pop %v243
    %v245 = vmul.f32 1.0, %v244
    %246 = vst [vmem:[#allocation8] sm:$0x3] %v245
    // Predicated region
    $region34: #{tpu_custom_call.1} parent=1 // pred_check
      _
    $region35: #{tpu_custom_call.1} parent=1 // pred_check_branch
      %248 = sbr.rel (0) target = $region37
    $region36: #{tpu_custom_call.1} parent=1 // pred_region
      %s250 = ssub.s32 32, 32
      %251 = vsyncadd [#allocation4], %s250
      %s253 = sshll.u32 [#allocation8], 4
      %s254 = int_to_ptr.vmem [resolvable:$true] %s253
      %256 = dma.vmem_to_hbm [thread:$0]  %s254, 32, %s5, [#allocation4]
    $region37: #{tpu_custom_call.1} parent=1 // pred_fallthru
      _
    // Predicated region
    $region38: #{tpu_custom_call.1} parent=1 // pred_check
      _
    $region39: #{tpu_custom_call.1} parent=1 // pred_check_branch
      %258 = sbr.rel (0) target = $region41
    $region40: #{tpu_custom_call.1} parent=1 // pred_region
      %259 = dma.done [#allocation4], 32
    $region41: #{tpu_custom_call.1} parent=1 // pred_fallthru
      _
    %260 = vsyncpa [#allocation3], 1
    %261 = vsyncpa [#allocation6], 1
    %262 = vsyncpa [#allocation4], 1

</llo_original>
